<compile_context>
chip_gen: v7x
topology: tpu7x:2x2x1
jax: 0.10.0
libtpu: 0.0.40
codegen_flags: <defaults>
</compile_context>

<pallas_src>
import numpy as np
import jax
import jax.numpy as jnp
from jax.experimental import pallas as pl
from jax.experimental.pallas import tpu as pltpu  # noqa: F401  (TPU backend)

# ----------------------------- config ---------------------------------------
Encodered_dim = 32      # dis_input_dim
dis_layers = 2          # nlayers
dis_hidden_dim = 64
dis_input_dropout = 0.1  # unused at inference
dis_dropout = 0.1        # unused at inference

LEAKY_SLOPE = 0.2


# ----------------------------- Pallas kernel --------------------------------
def make_discriminator_kernel(n_linear):
    """Build a fused-MLP kernel for `n_linear` Linear layers.

    Ref layout (all full-block VMEM residents):
      refs[0]            : x      (B, D_in)        float32
      refs[1+2i], [2+2i] : w_i    (D_i, D_{i+1})   float32  (pre-transposed)
                           b_i    (1, D_{i+1})     float32
      refs[-1]           : out    (B, 1)           float32
    """
    def kernel(*refs):
        x_ref = refs[0]
        out_ref = refs[-1]

        h = x_ref[...]                                   # (B, D_in)
        for i in range(n_linear):
            w = refs[1 + 2 * i][...]                     # (D_i, D_{i+1})
            b = refs[2 + 2 * i][...]                     # (1, D_{i+1})
            h = jnp.dot(h, w, preferred_element_type=jnp.float32) + b
            if i < n_linear - 1:
                # LeakyReLU(0.2)
                h = jnp.where(h >= 0.0, h, LEAKY_SLOPE * h)
        out_ref[...] = jax.nn.sigmoid(h)                 # (B, 1)

    return kernel


def discriminator_forward(params, inp):
    """Discriminator.forward (eval mode). inp: (B, Encodered_dim) -> (B,)."""
    assert inp.ndim == 2 and inp.shape[1] == Encodered_dim
    B = inp.shape[0]
    weights = params["weights"]   # list of (in, out) f32, already transposed
    biases = params["biases"]     # list of (1, out) f32
    n_linear = len(weights)

    args = [inp.astype(jnp.float32)]
    for w, b in zip(weights, biases):
        args.append(w)
        args.append(b)

    out = pl.pallas_call(
        make_discriminator_kernel(n_linear),
        out_shape=jax.ShapeDtypeStruct((B, 1), jnp.float32),
    )(*args)
    return out.reshape(-1)        # view(-1)


# ----------------------------- parameter init -------------------------------
def init_discriminator_params(key,
                              input_dim=Encodered_dim,
                              nlayers=dis_layers,
                              hidden_dim=dis_hidden_dim):
    """PyTorch nn.Linear default init (U(-1/sqrt(fan_in), 1/sqrt(fan_in))).

    Weights are stored PRE-TRANSPOSED as (in, out) and biases as (1, out) so the
    kernel call path does zero per-call layout work.
    """
    weights, biases = [], []
    keys = jax.random.split(key, 2 * (nlayers + 1))
    for i in range(nlayers + 1):
        d_in = input_dim if i == 0 else hidden_dim
        d_out = 1 if i == nlayers else hidden_dim
        bound = 1.0 / np.sqrt(d_in)
        w = jax.random.uniform(keys[2 * i], (d_in, d_out), jnp.float32,
                               -bound, bound)            # stored as (in, out)
        b = jax.random.uniform(keys[2 * i + 1], (1, d_out), jnp.float32,
                               -bound, bound)
        weights.append(w)
        biases.append(b)
    return {"weights": weights, "biases": biases}


# ----------------------------- main ------------------------------------------
if __name__ == "__main__":
    B = 2

    root = jax.random.PRNGKey(0)
    k_params, k_inp = jax.random.split(root, 2)

    params = init_discriminator_params(k_params)
    inp = jax.random.normal(k_inp, (B, Encodered_dim), jnp.float32)

    scores = discriminator_forward(params, inp)
    jax.block_until_ready(scores)

    assert scores.shape == (B,)
    assert scores.dtype == jnp.float32
    assert bool(jnp.all(jnp.isfinite(scores)))
    assert bool(jnp.all((scores > 0.0) & (scores < 1.0)))   # sigmoid range
    print("KERNEL_OK")
</pallas_src>

<mosaic_0001>
module attributes {stable_mosaic.version = 11 : i64} {
  func.func @kernel(%arg0: memref<2x32xf32, #tpu.memory_space<vmem>>, %arg1: memref<32x64xf32, #tpu.memory_space<vmem>>, %arg2: memref<1x64xf32, #tpu.memory_space<vmem>>, %arg3: memref<64x64xf32, #tpu.memory_space<vmem>>, %arg4: memref<1x64xf32, #tpu.memory_space<vmem>>, %arg5: memref<64x1xf32, #tpu.memory_space<vmem>>, %arg6: memref<1x1xf32, #tpu.memory_space<vmem>>, %arg7: memref<2x1xf32, #tpu.memory_space<vmem>>) attributes {dimension_semantics = [], scalar_prefetch = 0 : i64, scratch_operands = 0 : i64, tpu.core_type = #tpu.core_type<tc>} {
    %c0 = arith.constant 0 : index
    %c0_0 = arith.constant 0 : index
    %0 = vector.load %arg0[%c0, %c0_0] : memref<2x32xf32, #tpu.memory_space<vmem>>, vector<2x32xf32>
    %c0_1 = arith.constant 0 : index
    %c0_2 = arith.constant 0 : index
    %1 = vector.load %arg1[%c0_1, %c0_2] : memref<32x64xf32, #tpu.memory_space<vmem>>, vector<32x64xf32>
    %c0_3 = arith.constant 0 : index
    %c0_4 = arith.constant 0 : index
    %2 = vector.load %arg2[%c0_3, %c0_4] : memref<1x64xf32, #tpu.memory_space<vmem>>, vector<1x64xf32>
    %cst = arith.constant dense<0.000000e+00> : vector<2x64xf32>
    %3 = tpu.matmul %0, %1, %cst {dimension_numbers = #tpu.dot_dimension_numbers<[1], [0], [0], [1], [0, 0, 1, 1], [], []>} : vector<2x32xf32>, vector<32x64xf32>, vector<2x64xf32> -> vector<2x64xf32>
    %4 = vector.broadcast %2 : vector<1x64xf32> to vector<2x64xf32>
    %5 = arith.addf %3, %4 : vector<2x64xf32>
    %cst_5 = arith.constant 0.000000e+00 : f32
    %6 = vector.broadcast %cst_5 : f32 to vector<2x64xf32>
    %7 = arith.cmpf oge, %5, %6 : vector<2x64xf32>
    %cst_6 = arith.constant 2.000000e-01 : f32
    %8 = vector.broadcast %cst_6 : f32 to vector<2x64xf32>
    %9 = arith.mulf %8, %5 : vector<2x64xf32>
    %10 = arith.select %7, %5, %9 : vector<2x64xi1>, vector<2x64xf32>
    %c0_7 = arith.constant 0 : index
    %c0_8 = arith.constant 0 : index
    %11 = vector.load %arg3[%c0_7, %c0_8] : memref<64x64xf32, #tpu.memory_space<vmem>>, vector<64x64xf32>
    %c0_9 = arith.constant 0 : index
    %c0_10 = arith.constant 0 : index
    %12 = vector.load %arg4[%c0_9, %c0_10] : memref<1x64xf32, #tpu.memory_space<vmem>>, vector<1x64xf32>
    %cst_11 = arith.constant dense<0.000000e+00> : vector<2x64xf32>
    %13 = tpu.matmul %10, %11, %cst_11 {dimension_numbers = #tpu.dot_dimension_numbers<[1], [0], [0], [1], [0, 0, 1, 1], [], []>} : vector<2x64xf32>, vector<64x64xf32>, vector<2x64xf32> -> vector<2x64xf32>
    %14 = vector.broadcast %12 : vector<1x64xf32> to vector<2x64xf32>
    %15 = arith.addf %13, %14 : vector<2x64xf32>
    %cst_12 = arith.constant 0.000000e+00 : f32
    %16 = vector.broadcast %cst_12 : f32 to vector<2x64xf32>
    %17 = arith.cmpf oge, %15, %16 : vector<2x64xf32>
    %cst_13 = arith.constant 2.000000e-01 : f32
    %18 = vector.broadcast %cst_13 : f32 to vector<2x64xf32>
    %19 = arith.mulf %18, %15 : vector<2x64xf32>
    %20 = arith.select %17, %15, %19 : vector<2x64xi1>, vector<2x64xf32>
    %c0_14 = arith.constant 0 : index
    %c0_15 = arith.constant 0 : index
    %21 = vector.load %arg5[%c0_14, %c0_15] : memref<64x1xf32, #tpu.memory_space<vmem>>, vector<64x1xf32>
    %c0_16 = arith.constant 0 : index
    %c0_17 = arith.constant 0 : index
    %22 = vector.load %arg6[%c0_16, %c0_17] : memref<1x1xf32, #tpu.memory_space<vmem>>, vector<1x1xf32>
    %cst_18 = arith.constant dense<0.000000e+00> : vector<2x1xf32>
    %23 = tpu.matmul %20, %21, %cst_18 {dimension_numbers = #tpu.dot_dimension_numbers<[1], [0], [0], [1], [0, 0, 1, 1], [], []>} : vector<2x64xf32>, vector<64x1xf32>, vector<2x1xf32> -> vector<2x1xf32>
    %24 = vector.broadcast %22 : vector<1x1xf32> to vector<2x1xf32>
    %25 = arith.addf %23, %24 : vector<2x1xf32>
    %26 = arith.negf %25 : vector<2x1xf32>
    %27 = math.exp %26 : vector<2x1xf32>
    %cst_19 = arith.constant 1.000000e+00 : f32
    %28 = vector.broadcast %cst_19 : f32 to vector<2x1xf32>
    %29 = arith.addf %28, %27 : vector<2x1xf32>
    %30 = arith.divf %28, %29 : vector<2x1xf32>
    %c0_20 = arith.constant 0 : index
    %c0_21 = arith.constant 0 : index
    %31 = vector.load %arg7[%c0_20, %c0_21] : memref<2x1xf32, #tpu.memory_space<vmem>>, vector<2x1xf32>
    tpu.vector_store %arg7[%c0_20, %c0_21], %30 {strides = array<i32>} : memref<2x1xf32, #tpu.memory_space<vmem>>, vector<2x1xf32>,
    return
  }
}

</mosaic_0001>

<llo_original>
// kernel: tpu_custom_call.1
$region0: #{tpu_custom_call.1}
  #allocation0 [shape = 'u32[]', space=smem, size = 0x4, offset = 0x4, fixed_abs, tag = 'smem constant byte address 0x4 - core index']
  #allocation1 [shape = 'u32[144,128]{1,0:T(1,128)}', space=vmem, size = 0x12000, scoped, tag = 'internal scratch']
  #allocation2 [shape = 'f32[1,1]{1,0:T(1,128)S(1)}', space=vmem, size = 0x200, scoped, tag = 'scoped memory for tpu_custom_call.1']
  %s0 = inlined_call_operand.vmem [shape: f32[2,32], index: 0, kind: input, shape index: {}]
  %s1 = inlined_call_operand.hbm [shape: f32[32,64], index: 1, kind: input, shape index: {}]
  %s2 = inlined_call_operand.vmem [shape: f32[1,64], index: 2, kind: input, shape index: {}]
  %s3 = inlined_call_operand.vmem [shape: f32[64,64], index: 3, kind: input, shape index: {}]
  %s4 = inlined_call_operand.vmem [shape: f32[1,64], index: 4, kind: input, shape index: {}]
  %s5 = inlined_call_operand.vmem [shape: f32[64,1], index: 5, kind: input, shape index: {}]
  %s6 = inlined_call_operand.<no memory space> [shape: f32[1,1], index: 6, kind: input, shape index: {}]
  %s7 = inlined_call_operand.vmem [shape: f32[2,1], index: 7, kind: output, shape index: {}]
  %s8 = sld [smem:[#allocation0]]
  $region42: #{tpu_custom_call.1} parent=0
    _
  %s10 = ssub.s32 1, %s8
  %s11 = scalar_select 0, %s10, %s8
  %v12 = vstv %s6
  %13 = vst [vmem:[#allocation2] sm:$0x1] %v12
  $region1: #{tpu_custom_call.1} parent=0
    #allocation3 [shape = 'u8[16384]{0}', space=vmem, size = 0x4000, scoped, tag = 'input window, operand 1, single buffered']
    #allocation4 [shape = 's32[1]{0}', space=sflag, size = 0x4, scoped, tag = 'scoped memory for tpu_custom_call.1']
    %14 = vsyncpa [#allocation4], 0
    // Predicated region
    $region2: #{tpu_custom_call.1} parent=1 // pred_check
      _
    $region3: #{tpu_custom_call.1} parent=1 // pred_check_branch
      %16 = sbr.rel (0) target = $region5
    $region4: #{tpu_custom_call.1} parent=1 // pred_region
      _
    $region5: #{tpu_custom_call.1} parent=1 // pred_fallthru
      _
    // Predicated region
    $region6: #{tpu_custom_call.1} parent=1 // pred_check
      _
    $region7: #{tpu_custom_call.1} parent=1 // pred_check_branch
      %18 = sbr.rel (0) target = $region9
    $region8: #{tpu_custom_call.1} parent=1 // pred_region
      %s20 = ssub.s32 512, 512
      %21 = vsyncadd [#allocation4], %s20
      %s22 = sshll.u32 [#allocation3], 4
      %s23 = int_to_ptr.vmem [resolvable:$true] %s22
      %28 = dma.hbm_to_vmem [thread:$0]  %s1, 512, %s23, [#allocation4], 128, 128, 8
    $region9: #{tpu_custom_call.1} parent=1 // pred_fallthru
      _
    // Predicated region
    $region10: #{tpu_custom_call.1} parent=1 // pred_check
      _
    $region11: #{tpu_custom_call.1} parent=1 // pred_check_branch
      %30 = sbr.rel (0) target = $region13
    $region12: #{tpu_custom_call.1} parent=1 // pred_region
      _
    $region13: #{tpu_custom_call.1} parent=1 // pred_fallthru
      _
    // Predicated region
    $region14: #{tpu_custom_call.1} parent=1 // pred_check
      _
    $region15: #{tpu_custom_call.1} parent=1 // pred_check_branch
      %32 = sbr.rel (0) target = $region17
    $region16: #{tpu_custom_call.1} parent=1 // pred_region
      _
    $region17: #{tpu_custom_call.1} parent=1 // pred_fallthru
      _
    // Predicated region
    $region18: #{tpu_custom_call.1} parent=1 // pred_check
      _
    $region19: #{tpu_custom_call.1} parent=1 // pred_check_branch
      %34 = sbr.rel (0) target = $region21
    $region20: #{tpu_custom_call.1} parent=1 // pred_region
      _
    $region21: #{tpu_custom_call.1} parent=1 // pred_fallthru
      _
    // Predicated region
    $region22: #{tpu_custom_call.1} parent=1 // pred_check
      _
    $region23: #{tpu_custom_call.1} parent=1 // pred_check_branch
      %36 = sbr.rel (0) target = $region25
    $region24: #{tpu_custom_call.1} parent=1 // pred_region
      _
    $region25: #{tpu_custom_call.1} parent=1 // pred_fallthru
      _
    // Predicated region
    $region26: #{tpu_custom_call.1} parent=1 // pred_check
      _
    $region27: #{tpu_custom_call.1} parent=1 // pred_check_branch
      %38 = sbr.rel (0) target = $region29
    $region28: #{tpu_custom_call.1} parent=1 // pred_region
      _
    $region29: #{tpu_custom_call.1} parent=1 // pred_fallthru
      _
    // Predicated region
    $region30: #{tpu_custom_call.1} parent=1 // pred_check
      _
    $region31: #{tpu_custom_call.1} parent=1 // pred_check_branch
      %40 = sbr.rel (0) target = $region33
    $region32: #{tpu_custom_call.1} parent=1 // pred_region
      %41 = dma.done [#allocation4], 512
    $region33: #{tpu_custom_call.1} parent=1 // pred_fallthru
      _
    %v42 = vld [vmem:[%s0] sm:$0x3]
    %v43 = vld [vmem:[#allocation3] sm:$0xff]
    %v44 = vld [vmem:[#allocation3 + $0x8] sm:$0xff]
    %v45 = vld [vmem:[#allocation3 + $0x10] sm:$0xff]
    %v46 = vld [vmem:[#allocation3 + $0x18] sm:$0xff]
    %v47 = vld [vmem:[%s2] sm:$0x1]
    %v49 = vlaneseq
    %v50 = vshrl.u32 %v49, 7
    %v51 = vsub.s32 0, %v50
    %v52 = vrot.slane %v47, %v51
    %vm54 = vcmask 261120
    %v56 = vsel %vm54, %v42, 0
    %58 = vmatprep.subr.mxu0 0.0
    %59 = vmatpush1.msra.mxu0 %v43
    %60 = vmatprep.subr.mxu0 0.0
    %61 = vmatpush1.msra.mxu0 %v44
    %62 = vmatprep.subr.mxu0 0.0
    %63 = vmatpush1.msra.mxu0 %v45
    %64 = vmatprep.subr.mxu0 0.0
    %65 = vmatpush1.msra.mxu0 %v46
    %66 = vmatprep.subr.mxu0 0.0
    %67 = vmatpush1.msra.mxu0 0.0
    %68 = vmatprep.subr.mxu0 0.0
    %69 = vmatpush1.msra.mxu0 0.0
    %70 = vmatprep.subr.mxu0 0.0
    %71 = vmatpush1.msra.mxu0 0.0
    %72 = vmatprep.subr.mxu0 0.0
    %73 = vmatpush1.msra.mxu0 0.0
    %74 = vmatprep.subr.mxu0 0.0
    %75 = vmatpush1.msra.mxu0 0.0
    %76 = vmatprep.subr.mxu0 0.0
    %77 = vmatpush1.msra.mxu0 0.0
    %78 = vmatprep.subr.mxu0 0.0
    %79 = vmatpush1.msra.mxu0 0.0
    %80 = vmatprep.subr.mxu0 0.0
    %81 = vmatpush1.msra.mxu0 0.0
    %82 = vmatprep.subr.mxu0 0.0
    %83 = vmatpush1.msra.mxu0 0.0
    %84 = vmatprep.subr.mxu0 0.0
    %85 = vmatpush1.msra.mxu0 0.0
    %86 = vmatprep.subr.mxu0 0.0
    %87 = vmatpush1.msra.mxu0 0.0
    %88 = vmatprep.subr.mxu0 0.0
    %89 = vmatpush1.msra.mxu0 0.0
    %90 = vmatprep.subr.mxu0 0.0
    %91 = vmatpush1.msra.mxu0 0.0
    %92 = vmatprep.subr.mxu0 0.0
    %93 = vmatpush1.msra.mxu0 0.0
    %94 = vmatprep.subr.mxu0 0.0
    %95 = vmatpush1.msra.mxu0 0.0
    %96 = vmatprep.subr.mxu0 0.0
    %97 = vmatpush1.msra.mxu0 0.0
    %98 = vmatprep.subr.mxu0 0.0
    %99 = vmatpush1.msra.mxu0 0.0
    %100 = vmatprep.subr.mxu0 0.0
    %101 = vmatpush1.msra.mxu0 0.0
    %102 = vmatprep.subr.mxu0 0.0
    %103 = vmatpush1.msra.mxu0 0.0
    %104 = vmatprep.subr.mxu0 0.0
    %105 = vmatpush1.msra.mxu0 0.0
    %106 = vmatprep.subr.mxu0 0.0
    %107 = vmatpush1.msra.mxu0 0.0
    %108 = vmatprep.subr.mxu0 0.0
    %109 = vmatpush1.msra.mxu0 0.0
    %110 = vmatprep.subr.mxu0 0.0
    %111 = vmatpush1.msra.mxu0 0.0
    %112 = vmatprep.subr.mxu0 0.0
    %113 = vmatpush1.msra.mxu0 0.0
    %114 = vmatprep.subr.mxu0 0.0
    %115 = vmatpush1.msra.mxu0 0.0
    %116 = vmatprep.subr.mxu0 0.0
    %117 = vmatpush1.msra.mxu0 0.0
    %118 = vmatprep.subr.mxu0 0.0
    %119 = vmatpush1.msra.mxu0 0.0
    %120 = vmatprep.subr.mxu0 0.0
    %121 = vmatpush1.msra.mxu0 0.0
    %122 = vmatprep.mubr.f32.mxu0 0.0
    %123 = vmatmul.mubr.f32.gmra.mrb[0].mxu0 %v56
    %v124 = vpop.f32.mrb[0].mxu0
    %v125 = vadd.f32 %v52, %v124
    %v126 = vpop.f32.mrb[0].mxu0
    %127 = vdwg.mxu0
    %vm128 = vcmp.ge.f32.partialorder %v125, 0.0
    %v129 = vmul.f32 %v125, 0.2
    %v130 = vsel %vm128, %v125, %v129
    %v131 = vld [vmem:[%s3] sm:$0xff]
    %v132 = vld [vmem:[%s3 + $0x8] sm:$0xff]
    %v133 = vld [vmem:[%s3 + $0x10] sm:$0xff]
    %v134 = vld [vmem:[%s3 + $0x18] sm:$0xff]
    %v135 = vld [vmem:[%s3 + $0x20] sm:$0xff]
    %v136 = vld [vmem:[%s3 + $0x28] sm:$0xff]
    %v137 = vld [vmem:[%s3 + $0x30] sm:$0xff]
    %v138 = vld [vmem:[%s3 + $0x38] sm:$0xff]
    %v139 = vld [vmem:[%s4] sm:$0x1]
    %v141 = vlaneseq
    %v142 = vshrl.u32 %v141, 7
    %v143 = vsub.s32 0, %v142
    %v144 = vrot.slane %v139, %v143
    %vm146 = vcmask 523264
    %v148 = vsel %vm146, %v130, 0
    %150 = vmatprep.subr.mxu0 0.0
    %151 = vmatpush1.msra.mxu0 %v131
    %152 = vmatprep.subr.mxu0 0.0
    %153 = vmatpush1.msra.mxu0 %v132
    %154 = vmatprep.subr.mxu0 0.0
    %155 = vmatpush1.msra.mxu0 %v133
    %156 = vmatprep.subr.mxu0 0.0
    %157 = vmatpush1.msra.mxu0 %v134
    %158 = vmatprep.subr.mxu0 0.0
    %159 = vmatpush1.msra.mxu0 %v135
    %160 = vmatprep.subr.mxu0 0.0
    %161 = vmatpush1.msra.mxu0 %v136
    %162 = vmatprep.subr.mxu0 0.0
    %163 = vmatpush1.msra.mxu0 %v137
    %164 = vmatprep.subr.mxu0 0.0
    %165 = vmatpush1.msra.mxu0 %v138
    %166 = vmatprep.subr.mxu0 0.0
    %167 = vmatpush1.msra.mxu0 0.0
    %168 = vmatprep.subr.mxu0 0.0
    %169 = vmatpush1.msra.mxu0 0.0
    %170 = vmatprep.subr.mxu0 0.0
    %171 = vmatpush1.msra.mxu0 0.0
    %172 = vmatprep.subr.mxu0 0.0
    %173 = vmatpush1.msra.mxu0 0.0
    %174 = vmatprep.subr.mxu0 0.0
    %175 = vmatpush1.msra.mxu0 0.0
    %176 = vmatprep.subr.mxu0 0.0
    %177 = vmatpush1.msra.mxu0 0.0
    %178 = vmatprep.subr.mxu0 0.0
    %179 = vmatpush1.msra.mxu0 0.0
    %180 = vmatprep.subr.mxu0 0.0
    %181 = vmatpush1.msra.mxu0 0.0
    %182 = vmatprep.subr.mxu0 0.0
    %183 = vmatpush1.msra.mxu0 0.0
    %184 = vmatprep.subr.mxu0 0.0
    %185 = vmatpush1.msra.mxu0 0.0
    %186 = vmatprep.subr.mxu0 0.0
    %187 = vmatpush1.msra.mxu0 0.0
    %188 = vmatprep.subr.mxu0 0.0
    %189 = vmatpush1.msra.mxu0 0.0
    %190 = vmatprep.subr.mxu0 0.0
    %191 = vmatpush1.msra.mxu0 0.0
    %192 = vmatprep.subr.mxu0 0.0
    %193 = vmatpush1.msra.mxu0 0.0
    %194 = vmatprep.subr.mxu0 0.0
    %195 = vmatpush1.msra.mxu0 0.0
    %196 = vmatprep.subr.mxu0 0.0
    %197 = vmatpush1.msra.mxu0 0.0
    %198 = vmatprep.subr.mxu0 0.0
    %199 = vmatpush1.msra.mxu0 0.0
    %200 = vmatprep.subr.mxu0 0.0
    %201 = vmatpush1.msra.mxu0 0.0
    %202 = vmatprep.subr.mxu0 0.0
    %203 = vmatpush1.msra.mxu0 0.0
    %204 = vmatprep.subr.mxu0 0.0
    %205 = vmatpush1.msra.mxu0 0.0
    %206 = vmatprep.subr.mxu0 0.0
    %207 = vmatpush1.msra.mxu0 0.0
    %208 = vmatprep.subr.mxu0 0.0
    %209 = vmatpush1.msra.mxu0 0.0
    %210 = vmatprep.subr.mxu0 0.0
    %211 = vmatpush1.msra.mxu0 0.0
    %212 = vmatprep.subr.mxu0 0.0
    %213 = vmatpush1.msra.mxu0 0.0
    %214 = vmatprep.mubr.f32.mxu0 0.0
    %215 = vmatmul.mubr.f32.gmra.mrb[0].mxu0 %v148
    %v216 = vpop.f32.mrb[0].mxu0
    %v217 = vadd.f32 %v144, %v216
    %v218 = vpop.f32.mrb[0].mxu0
    %219 = vdwg.mxu0
    %vm220 = vcmp.ge.f32.partialorder %v217, 0.0
    %v221 = vmul.f32 %v217, 0.2
    %v222 = vsel %vm220, %v217, %v221
    %v223 = vld [vmem:[%s5] sm:$0xff]
    %v224 = vld [vmem:[%s5 + $0x8] sm:$0xff]
    %v225 = vld [vmem:[%s5 + $0x10] sm:$0xff]
    %v226 = vld [vmem:[%s5 + $0x18] sm:$0xff]
    %v227 = vld [vmem:[%s5 + $0x20] sm:$0xff]
    %v228 = vld [vmem:[%s5 + $0x28] sm:$0xff]
    %v229 = vld [vmem:[%s5 + $0x30] sm:$0xff]
    %v230 = vld [vmem:[%s5 + $0x38] sm:$0xff]
    %v231 = vld [vmem:[#allocation2] sm:$0x1]
    %v233 = vlaneseq
    %v234 = vshrl.u32 %v233, 7
    %v235 = vsub.s32 0, %v234
    %v236 = vrot.slane %v231, %v235
    %v239 = vsel %vm146, %v222, 0
    %241 = vmatprep.subr.mxu0 0.0
    %242 = vmatpush1.msra.mxu0 %v223
    %243 = vmatprep.subr.mxu0 0.0
    %244 = vmatpush1.msra.mxu0 %v224
    %245 = vmatprep.subr.mxu0 0.0
    %246 = vmatpush1.msra.mxu0 %v225
    %247 = vmatprep.subr.mxu0 0.0
    %248 = vmatpush1.msra.mxu0 %v226
    %249 = vmatprep.subr.mxu0 0.0
    %250 = vmatpush1.msra.mxu0 %v227
    %251 = vmatprep.subr.mxu0 0.0
    %252 = vmatpush1.msra.mxu0 %v228
    %253 = vmatprep.subr.mxu0 0.0
    %254 = vmatpush1.msra.mxu0 %v229
    %255 = vmatprep.subr.mxu0 0.0
    %256 = vmatpush1.msra.mxu0 %v230
    %257 = vmatprep.subr.mxu0 0.0
    %258 = vmatpush1.msra.mxu0 0.0
    %259 = vmatprep.subr.mxu0 0.0
    %260 = vmatpush1.msra.mxu0 0.0
    %261 = vmatprep.subr.mxu0 0.0
    %262 = vmatpush1.msra.mxu0 0.0
    %263 = vmatprep.subr.mxu0 0.0
    %264 = vmatpush1.msra.mxu0 0.0
    %265 = vmatprep.subr.mxu0 0.0
    %266 = vmatpush1.msra.mxu0 0.0
    %267 = vmatprep.subr.mxu0 0.0
    %268 = vmatpush1.msra.mxu0 0.0
    %269 = vmatprep.subr.mxu0 0.0
    %270 = vmatpush1.msra.mxu0 0.0
    %271 = vmatprep.subr.mxu0 0.0
    %272 = vmatpush1.msra.mxu0 0.0
    %273 = vmatprep.subr.mxu0 0.0
    %274 = vmatpush1.msra.mxu0 0.0
    %275 = vmatprep.subr.mxu0 0.0
    %276 = vmatpush1.msra.mxu0 0.0
    %277 = vmatprep.subr.mxu0 0.0
    %278 = vmatpush1.msra.mxu0 0.0
    %279 = vmatprep.subr.mxu0 0.0
    %280 = vmatpush1.msra.mxu0 0.0
    %281 = vmatprep.subr.mxu0 0.0
    %282 = vmatpush1.msra.mxu0 0.0
    %283 = vmatprep.subr.mxu0 0.0
    %284 = vmatpush1.msra.mxu0 0.0
    %285 = vmatprep.subr.mxu0 0.0
    %286 = vmatpush1.msra.mxu0 0.0
    %287 = vmatprep.subr.mxu0 0.0
    %288 = vmatpush1.msra.mxu0 0.0
    %289 = vmatprep.subr.mxu0 0.0
    %290 = vmatpush1.msra.mxu0 0.0
    %291 = vmatprep.subr.mxu0 0.0
    %292 = vmatpush1.msra.mxu0 0.0
    %293 = vmatprep.subr.mxu0 0.0
    %294 = vmatpush1.msra.mxu0 0.0
    %295 = vmatprep.subr.mxu0 0.0
    %296 = vmatpush1.msra.mxu0 0.0
    %297 = vmatprep.subr.mxu0 0.0
    %298 = vmatpush1.msra.mxu0 0.0
    %299 = vmatprep.subr.mxu0 0.0
    %300 = vmatpush1.msra.mxu0 0.0
    %301 = vmatprep.subr.mxu0 0.0
    %302 = vmatpush1.msra.mxu0 0.0
    %303 = vmatprep.subr.mxu0 0.0
    %304 = vmatpush1.msra.mxu0 0.0
    %305 = vmatprep.mubr.f32.mxu0 0.0
    %306 = vmatmul.mubr.f32.gmra.mrb[0].mxu0 %v239
    %v307 = vpop.f32.mrb[0].mxu0
    %v308 = vadd.f32 %v236, %v307
    %v309 = vpop.f32.mrb[0].mxu0
    %310 = vdwg.mxu0
    %v311 = vxor.u32 %v308, 2147483648
    %v312 = vmul.f32 %v311, 1.442695
    %v313 = vpow.pop %v312
    %v314 = vadd.f32 %v313, 1.0
    %v315 = vrcp.pop %v314
    %v316 = vmul.f32 1.0, %v315
    %vm317 = vcmask 1024
    %318 = vst.msk [vmem:[%s7] sm:$0x3] %vm317, %v316
    // Predicated region
    $region34: #{tpu_custom_call.1} parent=1 // pred_check
      _
    $region35: #{tpu_custom_call.1} parent=1 // pred_check_branch
      %320 = sbr.rel (0) target = $region37
    $region36: #{tpu_custom_call.1} parent=1 // pred_region
      _
    $region37: #{tpu_custom_call.1} parent=1 // pred_fallthru
      _
    // Predicated region
    $region38: #{tpu_custom_call.1} parent=1 // pred_check
      _
    $region39: #{tpu_custom_call.1} parent=1 // pred_check_branch
      %322 = sbr.rel (0) target = $region41
    $region40: #{tpu_custom_call.1} parent=1 // pred_region
      _
    $region41: #{tpu_custom_call.1} parent=1 // pred_fallthru
      _
    %323 = vsyncpa [#allocation4], 1

</llo_original>
